<compile_context>
chip_gen: v7x
topology: tpu7x:2x2x1
jax: 0.10.0
libtpu: 0.0.40
codegen_flags: <defaults>
</compile_context>

<pallas_src>
import functools
import math

import jax
import jax.numpy as jnp
from jax.experimental import pallas as pl
from jax.experimental.pallas import tpu as pltpu


def _margin_loss_kernel(vc_ref, sel_ref, out_ref, *, m_plus, m_minus,
                        lambda_val, chunk_rows, num_chunks):
    """One grid step: lane-wise partial sums of the margin loss over a row tile.

    vc_ref : (tile_rows, 128) v_c values, lane-dense flat packing (input dtype)
    sel_ref: (tile_rows, 128) int8 one-hot map (1 where class == target)
    out_ref: (1, 128) f32 per-lane partial sums for this tile
    """

    def chunk_body(c, acc):
        r0 = pl.multiple_of(c * chunk_rows, chunk_rows)
        vc = vc_ref[pl.ds(r0, chunk_rows), :].astype(jnp.float32)      # (chunk, 128)
        hit = sel_ref[pl.ds(r0, chunk_rows), :].astype(jnp.int32) != 0  # (chunk, 128)

        present = jnp.maximum(m_plus - vc, 0.0)
        present = present * present
        absent = jnp.maximum(vc - m_minus, 0.0)
        absent = absent * absent

        # One-hot select instead of labels*present + lambda*(1-labels)*absent.
        l_c = jnp.where(hit, present, lambda_val * absent)

        # Fold this chunk's sublanes into the (8, 128) accumulator (pure VALU adds).
        for j in range(chunk_rows // 8):
            acc = acc + l_c[j * 8:(j + 1) * 8, :]
        return acc

    acc = jax.lax.fori_loop(0, num_chunks, chunk_body,
                            jnp.zeros((8, 128), jnp.float32),
                            unroll=min(8, num_chunks))

    # One final sublane reduce -> lane-dense (1, 128) output block.
    out_ref[...] = jnp.sum(acc, axis=0, keepdims=True)


def _pick_tile_rows(packed_rows, *, cap_rows=8192, budget_bytes=24 * 1024 * 1024):
    """Pick a row-tile (multiple of 32) for the lane-dense (rows, 128) slabs.

    Budget covers double-buffered f32 (4 B) + int8 (1 B) input blocks; the cap
    keeps the working set well inside the 32 MiB vmem limit on all generations.
    Aims for >= 2 grid steps when there is enough data so the "parallel" axis
    can span both v7x TensorCores (the extra step costs ~0.35 us on 1-TC chips).
    """
    max_rows = budget_bytes // (2 * 128 * (4 + 1))
    cap = max(32, (min(cap_rows, max_rows) // 32) * 32)
    rows32 = pl.cdiv(packed_rows, 32) * 32
    ntiles = 1 if rows32 <= 32 else max(2, pl.cdiv(rows32, cap))
    tile = pl.cdiv(pl.cdiv(rows32, ntiles), 32) * 32
    return int(min(tile, cap, rows32))


def margin_loss(v_c, target, *, m_plus=0.9, m_minus=0.1, lambda_val=0.5,
                tile_rows=None, vmem_limit_bytes=32 * 1024 * 1024):
    """Pallas implementation of MarginLoss.forward. Returns a scalar f32."""
    B, C = v_c.shape
    assert target.shape == (B,), (target.shape, B)

    # int8 one-hot label map (adds only ~25% HBM traffic on top of f32 v_c).
    onehot = (target.astype(jnp.int32)[:, None]
              == jnp.arange(C, dtype=jnp.int32)[None, :]).astype(jnp.int8)

    n = B * C
    packed_rows = pl.cdiv(n, 128)
    if tile_rows is None:
        tile_rows = _pick_tile_rows(packed_rows)
    assert tile_rows % 32 == 0 and tile_rows > 0, tile_rows
    num_tiles = pl.cdiv(packed_rows, tile_rows)
    padded_elems = num_tiles * tile_rows * 128
    pad = padded_elems - n

    # Lane-dense repack: flatten (B, C) and the one-hot map, pad, reshape to
    # (rows, 128).  Padded elements contribute exactly zero:
    #   v_c_pad = m_minus - 1  -> relu(v_c_pad - m_minus)^2 == 0 (any dtype)
    #   one_hot_pad = 0        -> the "present" branch is never selected.
    pad_value = float(m_minus) - 1.0
    vc_flat = jnp.pad(v_c.reshape(-1), (0, pad), constant_values=pad_value)
    sel_flat = jnp.pad(onehot.reshape(-1), (0, pad), constant_values=0)
    vc2 = vc_flat.reshape(num_tiles * tile_rows, 128)
    sel2 = sel_flat.reshape(num_tiles * tile_rows, 128)

    # In-kernel strip-mining parameters (chunk divides tile, >= 32 rows).
    chunk_rows = math.gcd(tile_rows, 256)
    num_chunks = tile_rows // chunk_rows

    kernel = functools.partial(
        _margin_loss_kernel,
        m_plus=float(m_plus), m_minus=float(m_minus),
        lambda_val=float(lambda_val),
        chunk_rows=chunk_rows, num_chunks=num_chunks)

    partials = pl.pallas_call(
        kernel,
        out_shape=jax.ShapeDtypeStruct((num_tiles, 128), jnp.float32),
        grid_spec=pltpu.PrefetchScalarGridSpec(
            num_scalar_prefetch=0,
            grid=(num_tiles,),
            in_specs=[
                pl.BlockSpec((tile_rows, 128), lambda i: (i, 0)),
                pl.BlockSpec((tile_rows, 128), lambda i: (i, 0)),
            ],
            out_specs=pl.BlockSpec((1, 128), lambda i: (i, 0)),
        ),
        compiler_params=pltpu.CompilerParams(
            dimension_semantics=("parallel",),
            vmem_limit_bytes=vmem_limit_bytes,
        ),
    )(vc2, sel2)

    # Tiny cross-tile / cross-lane reduction + batch mean in plain JAX.
    return jnp.sum(partials) / jnp.float32(B)


def _ref_margin_loss(v_c, target, num_classes, m_plus=0.9, m_minus=0.1,
                     lambda_val=0.5):
    labels = jax.nn.one_hot(target, num_classes, dtype=jnp.float32)
    present = jnp.maximum(m_plus - v_c.astype(jnp.float32), 0.0) ** 2
    absent = jnp.maximum(v_c.astype(jnp.float32) - m_minus, 0.0) ** 2
    l_c = labels * present + lambda_val * (1.0 - labels) * absent
    return l_c.sum(axis=1).mean()


if __name__ == "__main__":
    key = jax.random.PRNGKey(0)
    k1, k2 = jax.random.split(key)

    # Small shape consistent with the module: capsule lengths (batch, classes).
    batch, num_classes = 8, 10
    m_plus, m_minus, lambda_val = 0.9, 0.1, 0.5

    v_c = jax.random.uniform(k1, (batch, num_classes), dtype=jnp.float32)
    target = jax.random.randint(k2, (batch,), 0, num_classes, dtype=jnp.int32)

    loss = margin_loss(v_c, target, m_plus=m_plus, m_minus=m_minus,
                       lambda_val=lambda_val)
    jax.block_until_ready(loss)
    ref = _ref_margin_loss(v_c, target, num_classes, m_plus, m_minus, lambda_val)
    assert jnp.allclose(loss, ref, atol=1e-5, rtol=1e-5), (loss, ref)

    # Second check: larger batch -> multi-tile grid, multi-chunk in-kernel loop,
    # ragged flat length (exercises host-side zero-contribution padding).
    k3, k4 = jax.random.split(k1)
    batch2, classes2 = 8192, 10
    v_c2 = jax.random.uniform(k3, (batch2, classes2), dtype=jnp.float32)
    target2 = jax.random.randint(k4, (batch2,), 0, classes2, dtype=jnp.int32)

    loss2 = margin_loss(v_c2, target2)
    jax.block_until_ready(loss2)
    ref2 = _ref_margin_loss(v_c2, target2, classes2)
    assert jnp.allclose(loss2, ref2, atol=1e-5, rtol=1e-4), (loss2, ref2)

    # Third check: explicit tile_rows (multiple of 32) with a ragged last tile.
    k5, k6 = jax.random.split(k3)
    batch3, classes3 = 1000, 16
    v_c3 = jax.random.uniform(k5, (batch3, classes3), dtype=jnp.float32)
    target3 = jax.random.randint(k6, (batch3,), 0, classes3, dtype=jnp.int32)

    loss3 = margin_loss(v_c3, target3, tile_rows=96)
    jax.block_until_ready(loss3)
    ref3 = _ref_margin_loss(v_c3, target3, classes3)
    assert jnp.allclose(loss3, ref3, atol=1e-5, rtol=1e-4), (loss3, ref3)

    print("KERNEL_OK")
</pallas_src>

<mosaic_0001>
module attributes {stable_mosaic.version = 11 : i64} {
  func.func @_margin_loss_kernel(%arg0: i32, %arg1: memref<32x128xf32, #tpu.memory_space<vmem>>, %arg2: memref<32x128xi8, #tpu.memory_space<vmem>>, %arg3: memref<1x128xf32, #tpu.memory_space<vmem>>) attributes {dimension_semantics = [#tpu.dimension_semantics<parallel>], iteration_bounds = array<i64: 1>, scalar_prefetch = 0 : i64, scratch_operands = 0 : i64, tpu.core_type = #tpu.core_type<tc>, window_params = [{transform_indices = @transform_0, window_bounds = array<i64: 32, 128>}, {transform_indices = @transform_1, window_bounds = array<i64: 32, 128>}, {transform_indices = @transform_2, window_bounds = array<i64: 1, 128>}]} {
    %cst = arith.constant 0.000000e+00 : f32
    %0 = vector.broadcast %cst : f32 to vector<8x128xf32>
    %c0_i32 = arith.constant 0 : i32
    %c32_i32 = arith.constant 32 : i32
    %1 = arith.muli %c0_i32, %c32_i32 : i32
    %2 = tpu.assume_multiple %1, 32 : i32
    %3 = arith.index_cast %2 : i32 to index
    %c0 = arith.constant 0 : index
    %4 = vector.load %arg1[%3, %c0] : memref<32x128xf32, #tpu.memory_space<vmem>>, vector<32x128xf32>
    %5 = arith.index_cast %2 : i32 to index
    %c0_0 = arith.constant 0 : index
    %6 = vector.load %arg2[%5, %c0_0] : memref<32x128xi8, #tpu.memory_space<vmem>>, vector<32x128xi8>
    %7 = arith.extsi %6 : vector<32x128xi8> to vector<32x128xi32>
    %c0_i32_1 = arith.constant 0 : i32
    %8 = vector.broadcast %c0_i32_1 : i32 to vector<32x128xi32>
    %9 = arith.cmpi ne, %7, %8 : vector<32x128xi32>
    %cst_2 = arith.constant 0.899999976 : f32
    %10 = vector.broadcast %cst_2 : f32 to vector<32x128xf32>
    %11 = arith.subf %10, %4 : vector<32x128xf32>
    %cst_3 = arith.constant 0.000000e+00 : f32
    %12 = vector.broadcast %cst_3 : f32 to vector<32x128xf32>
    %13 = arith.maximumf %11, %12 : vector<32x128xf32>
    %14 = arith.mulf %13, %13 : vector<32x128xf32>
    %cst_4 = arith.constant 1.000000e-01 : f32
    %15 = vector.broadcast %cst_4 : f32 to vector<32x128xf32>
    %16 = arith.subf %4, %15 : vector<32x128xf32>
    %cst_5 = arith.constant 0.000000e+00 : f32
    %17 = vector.broadcast %cst_5 : f32 to vector<32x128xf32>
    %18 = arith.maximumf %16, %17 : vector<32x128xf32>
    %19 = arith.mulf %18, %18 : vector<32x128xf32>
    %cst_6 = arith.constant 5.000000e-01 : f32
    %20 = vector.broadcast %cst_6 : f32 to vector<32x128xf32>
    %21 = arith.mulf %20, %19 : vector<32x128xf32>
    %22 = arith.select %9, %14, %21 : vector<32x128xi1>, vector<32x128xf32>
    %23 = vector.extract_strided_slice %22 {offsets = [0, 0], sizes = [8, 128], strides = [1, 1]} : vector<32x128xf32> to vector<8x128xf32>
    %24 = arith.addf %0, %23 : vector<8x128xf32>
    %25 = vector.extract_strided_slice %22 {offsets = [8, 0], sizes = [8, 128], strides = [1, 1]} : vector<32x128xf32> to vector<8x128xf32>
    %26 = arith.addf %24, %25 : vector<8x128xf32>
    %27 = vector.extract_strided_slice %22 {offsets = [16, 0], sizes = [8, 128], strides = [1, 1]} : vector<32x128xf32> to vector<8x128xf32>
    %28 = arith.addf %26, %27 : vector<8x128xf32>
    %29 = vector.extract_strided_slice %22 {offsets = [24, 0], sizes = [8, 128], strides = [1, 1]} : vector<32x128xf32> to vector<8x128xf32>
    %30 = arith.addf %28, %29 : vector<8x128xf32>
    %c1_i32 = arith.constant 1 : i32
    %cst_7 = arith.constant dense<0.000000e+00> : vector<128xf32>
    %31 = vector.multi_reduction <add>, %30, %cst_7 [0] : vector<8x128xf32> to vector<128xf32>
    %32 = vector.shape_cast %31 : vector<128xf32> to vector<1x128xf32>
    %c0_8 = arith.constant 0 : index
    %c0_9 = arith.constant 0 : index
    %33 = vector.load %arg3[%c0_8, %c0_9] : memref<1x128xf32, #tpu.memory_space<vmem>>, vector<1x128xf32>
    tpu.vector_store %arg3[%c0_8, %c0_9], %32 {strides = array<i32>} : memref<1x128xf32, #tpu.memory_space<vmem>>, vector<1x128xf32>,
    return
  }
  func.func @transform_0(%arg0: i32) -> (i32, i32) {
    %c0_i32 = arith.constant 0 : i32
    %c0_i32_0 = arith.constant 0 : i32
    return %arg0, %c0_i32 : i32, i32
  }
  func.func @transform_1(%arg0: i32) -> (i32, i32) {
    %c0_i32 = arith.constant 0 : i32
    %c0_i32_0 = arith.constant 0 : i32
    return %arg0, %c0_i32 : i32, i32
  }
  func.func @transform_2(%arg0: i32) -> (i32, i32) {
    %c0_i32 = arith.constant 0 : i32
    %c0_i32_0 = arith.constant 0 : i32
    return %arg0, %c0_i32 : i32, i32
  }
}

</mosaic_0001>

<llo_original>
// kernel: tpu_custom_call.1
$region0: #{tpu_custom_call.1}
  #allocation0 [shape = 'u32[]', space=smem, size = 0x4, offset = 0x4, fixed_abs, tag = 'smem constant byte address 0x4 - core index']
  #allocation1 [shape = 'u32[144,128]{1,0:T(1,128)}', space=vmem, size = 0x12000, scoped, tag = 'internal scratch']
  %s0 = inlined_call_operand.hbm [shape: f32[32,128], index: 0, kind: input, shape index: {}]
  %s1 = inlined_call_operand.hbm [shape: s8[32,128], index: 1, kind: input, shape index: {}]
  %s2 = inlined_call_operand.hbm [shape: f32[1,128], index: 2, kind: output, shape index: {}]
  %s3 = sld [smem:[#allocation0]]
  $region26: #{tpu_custom_call.1} parent=0
    _
  %s5 = ssub.s32 1, %s3
  %s6 = scalar_select 0, %s5, %s3
  $region1: #{tpu_custom_call.1} parent=0
    #allocation2 [shape = 'u8[16384]{0}', space=vmem, size = 0x4000, scoped, tag = 'input window, operand 0, single buffered']
    #allocation3 [shape = 's32[1]{0}', space=sflag, size = 0x4, scoped, tag = 'scoped memory for tpu_custom_call.1']
    #allocation4 [shape = 's32[1]{0}', space=sflag, size = 0x4, scoped, tag = 'scoped memory for tpu_custom_call.1']
    #allocation5 [shape = 'u8[4096]{0}', space=vmem, size = 0x1000, scoped, tag = 'input window, operand 1, single buffered']
    #allocation6 [shape = 's32[1]{0}', space=sflag, size = 0x4, scoped, tag = 'scoped memory for tpu_custom_call.1']
    #allocation7 [shape = 'u8[512]{0}', space=vmem, size = 0x400, scoped, tag = 'output window, operand 0, single buffered']
    %7 = vsyncpa [#allocation3], 0
    %8 = vsyncpa [#allocation6], 0
    %9 = vsyncpa [#allocation4], 0
    // Predicated region
    $region2: #{tpu_custom_call.1} parent=1 // pred_check
      _
    $region3: #{tpu_custom_call.1} parent=1 // pred_check_branch
      %11 = sbr.rel (0) target = $region5
    $region4: #{tpu_custom_call.1} parent=1 // pred_region
      %s13 = ssub.s32 512, 512
      %14 = vsyncadd [#allocation3], %s13
      %s15 = sshll.u32 [#allocation2], 4
      %s16 = int_to_ptr.vmem [resolvable:$true] %s15
      %21 = dma.hbm_to_vmem [thread:$0]  %s0, 512, %s16, [#allocation3], 128, 128, 8
    $region5: #{tpu_custom_call.1} parent=1 // pred_fallthru
      _
    // Predicated region
    $region6: #{tpu_custom_call.1} parent=1 // pred_check
      _
    $region7: #{tpu_custom_call.1} parent=1 // pred_check_branch
      %23 = sbr.rel (0) target = $region9
    $region8: #{tpu_custom_call.1} parent=1 // pred_region
      %s25 = ssub.s32 128, 128
      %26 = vsyncadd [#allocation6], %s25
      %s28 = sshll.u32 [#allocation5], 4
      %s29 = int_to_ptr.vmem [resolvable:$true] %s28
      %31 = dma.hbm_to_vmem [thread:$0]  %s1, 128, %s29, [#allocation6]
    $region9: #{tpu_custom_call.1} parent=1 // pred_fallthru
      _
    // Predicated region
    $region10: #{tpu_custom_call.1} parent=1 // pred_check
      _
    $region11: #{tpu_custom_call.1} parent=1 // pred_check_branch
      %33 = sbr.rel (0) target = $region13
    $region12: #{tpu_custom_call.1} parent=1 // pred_region
      %34 = dma.done [#allocation3], 512
    $region13: #{tpu_custom_call.1} parent=1 // pred_fallthru
      _
    // Predicated region
    $region14: #{tpu_custom_call.1} parent=1 // pred_check
      _
    $region15: #{tpu_custom_call.1} parent=1 // pred_check_branch
      %36 = sbr.rel (0) target = $region17
    $region16: #{tpu_custom_call.1} parent=1 // pred_region
      %37 = dma.done [#allocation6], 128
    $region17: #{tpu_custom_call.1} parent=1 // pred_fallthru
      _
    %v38 = vld [vmem:[#allocation2] sm:$0xff]
    %v39 = vld [vmem:[#allocation2 + $0x8] sm:$0xff]
    %v40 = vld [vmem:[#allocation2 + $0x10] sm:$0xff]
    %v41 = vld [vmem:[#allocation2 + $0x18] sm:$0xff]
    %v42 = vld [vmem:[#allocation5] sm:$0xff]
    %v43 = vunpack.c.0.s8 %v42
    %v44 = vunpack.c.1.s8 %v42
    %v45 = vunpack.c.2.s8 %v42
    %v46 = vunpack.c.3.s8 %v42
    %vm47 = vcmp.ne.s32.totalorder %v43, 0
    %vm48 = vcmp.ne.s32.totalorder %v44, 0
    %vm49 = vcmp.ne.s32.totalorder %v45, 0
    %vm50 = vcmp.ne.s32.totalorder %v46, 0
    %v51 = vsub.f32 0.9, %v38
    %v52 = vsub.f32 0.9, %v39
    %v53 = vsub.f32 0.9, %v40
    %v54 = vsub.f32 0.9, %v41
    %v55 = vmax.f32 %v51, 0.0
    %v56 = vmax.f32 %v52, 0.0
    %v57 = vmax.f32 %v53, 0.0
    %v58 = vmax.f32 %v54, 0.0
    %v59 = vmul.f32 %v55, %v55
    %v60 = vmul.f32 %v56, %v56
    %v61 = vmul.f32 %v57, %v57
    %v62 = vmul.f32 %v58, %v58
    %v63 = vsub.f32 %v38, 0.1
    %v64 = vsub.f32 %v39, 0.1
    %v65 = vsub.f32 %v40, 0.1
    %v66 = vsub.f32 %v41, 0.1
    %v67 = vmax.f32 %v63, 0.0
    %v68 = vmax.f32 %v64, 0.0
    %v69 = vmax.f32 %v65, 0.0
    %v70 = vmax.f32 %v66, 0.0
    %v71 = vmul.f32 %v67, %v67
    %v72 = vmul.f32 %v68, %v68
    %v73 = vmul.f32 %v69, %v69
    %v74 = vmul.f32 %v70, %v70
    %v75 = vmul.f32 %v71, 0.5
    %v76 = vmul.f32 %v72, 0.5
    %v77 = vmul.f32 %v73, 0.5
    %v78 = vmul.f32 %v74, 0.5
    %v79 = vsel %vm47, %v59, %v75
    %v80 = vsel %vm48, %v60, %v76
    %v81 = vsel %vm49, %v61, %v77
    %v82 = vsel %vm50, %v62, %v78
    %v83 = vadd.f32 %v79, 0.0
    %v84 = vadd.f32 %v83, %v80
    %v85 = vadd.f32 %v84, %v81
    %v86 = vadd.f32 %v85, %v82
    %v87 = vrot.slane %v86, 4
    %v88 = vadd.f32 %v86, %v87
    %v89 = vrot.slane %v88, 2
    %v90 = vadd.f32 %v88, %v89
    %v91 = vrot.slane %v90, 1
    %v92 = vadd.f32 %v90, %v91
    %93 = vst [vmem:[#allocation7] sm:$0x1] %v92
    // Predicated region
    $region18: #{tpu_custom_call.1} parent=1 // pred_check
      _
    $region19: #{tpu_custom_call.1} parent=1 // pred_check_branch
      %95 = sbr.rel (0) target = $region21
    $region20: #{tpu_custom_call.1} parent=1 // pred_region
      %s97 = ssub.s32 16, 16
      %98 = vsyncadd [#allocation4], %s97
      %s100 = sshll.u32 [#allocation7], 4
      %s101 = int_to_ptr.vmem [resolvable:$true] %s100
      %103 = dma.vmem_to_hbm [thread:$0]  %s101, 16, %s2, [#allocation4]
    $region21: #{tpu_custom_call.1} parent=1 // pred_fallthru
      _
    // Predicated region
    $region22: #{tpu_custom_call.1} parent=1 // pred_check
      _
    $region23: #{tpu_custom_call.1} parent=1 // pred_check_branch
      %105 = sbr.rel (0) target = $region25
    $region24: #{tpu_custom_call.1} parent=1 // pred_region
      %106 = dma.done [#allocation4], 16
    $region25: #{tpu_custom_call.1} parent=1 // pred_fallthru
      _
    %107 = vsyncpa [#allocation3], 1
    %108 = vsyncpa [#allocation6], 1
    %109 = vsyncpa [#allocation4], 1

</llo_original>
